<compile_context>
chip_gen: v6e
topology: v6e:2x2x1
jax: 0.10.0
libtpu: 0.0.40
codegen_flags: <defaults>
</compile_context>

<pallas_src>
import functools

import jax
import jax.numpy as jnp
from jax import lax
from jax.experimental import pallas as pl
from jax.experimental.pallas import tpu as pltpu

SIGMA_DATA = 0.2      # sigma_data of KDiffusion
SIGMA_MEAN = -3.0     # LogNormal sigma_distribution(mean, std) (Karras-style sampler)
SIGMA_STD = 1.0


# ---------------------------------------------------------------------------
# Kernel
# ---------------------------------------------------------------------------
def _kdiffusion_kernel(sig_ref, x_ref, noise_ref, w1aug_ref, w2_ref, out_ref, *,
                       sigma_data, n_valid, block_lanes, bf16_tanh):
    """One grid step == one lane-dense block of `block_lanes` (batch*time) lanes.

    sig_ref:    (1, N)    per-lane sigma (sigma[b] repeated T times; 1.0 in pad lanes)
    x_ref:      (C, N)    clean signal, channel-major (lane = b*T + t; 0 in pad lanes)
    noise_ref:  (C, N)    noise (0 in pad lanes)
    w1aug_ref:  (H, C+2)  [W1 | tw | tb]   (resident across the grid)
    w2_ref:     (C, H)                     (resident across the grid)
    out_ref:    (1, 1, 128) broadcast of this block's weighted SSE partial sum
    """
    sig = sig_ref[...]                                    # (1, N)
    x = x_ref[...]                                        # (C, N)
    noise = noise_ref[...]                                # (C, N)

    sd = sigma_data
    inv_sqrt = lax.rsqrt(sig * sig + sd * sd)             # (1, N)   EUP
    c_noise = jnp.log(sig) * 0.25                         # (1, N)   EUP

    # Valid-lane mask doubles as the constant-1 row of the augmented operand:
    # padded lanes get an all-zero augmented column (x/noise are zero-padded too),
    # so tanh(0) = 0, x_pred = 0 and the residual is exactly 0 there.
    lane = lax.broadcasted_iota(jnp.int32, sig.shape, dimension=1)
    valid = ((pl.program_id(0) * block_lanes + lane) < n_valid).astype(jnp.float32)

    # net(c_in * x_noisy, c_noise): h = tanh(W1 @ x_in + tw * c_noise + tb) with the
    # bias folded into the MXU contraction (K = C + 2) instead of a VALU outer product.
    # TODO(synk): the real `net` is an arbitrary wrapped nn.Module (U-Net); this small
    # channel-mixing MLP with a scalar time embedding stands in for it.
    x_in = inv_sqrt * (x + sig * noise)                                  # c_in * x_noisy
    x_aug = jnp.concatenate([x_in, c_noise * valid, valid], axis=0)      # (C+2, N)
    h = jnp.dot(w1aug_ref[...], x_aug, preferred_element_type=jnp.float32)   # (H, N)
    if bf16_tanh:
        # v6e/v7x: bf16 EUP path doubles tanh throughput (EUP is the critical slot).
        h = jnp.tanh(h.astype(jnp.bfloat16)).astype(jnp.float32)
    else:
        # v5e / unknown: no bf16 EUP path, keep f32.
        h = jnp.tanh(h)
    x_pred = jnp.dot(w2_ref[...], h, preferred_element_type=jnp.float32)     # (C, N)

    # Weighted residual: sqrt(loss_weight) * (x_denoised - x)
    #   == x_pred + (sd*inv_sqrt)*noise - (sig*inv_sqrt/sd)*x
    # (sqrt(weight)*c_out == 1), so c_skip / x_denoised / diff / weight and both f32
    # divides are eliminated; only the rsqrt above is needed.
    a_noise = sd * inv_sqrt                               # (1, N)
    a_x = (sig * inv_sqrt) * (1.0 / sd)                   # (1, N), divide-by-constant
    r = x_pred + a_noise * noise - a_x * x                # (C, N)

    # Per-block partial weighted SSE.
    # TODO(synk): for very large blocks (>~10^7 elems), use a hierarchical
    # (per-sublane then lane) reduction to tighten f32 accumulation.
    partial = jnp.sum(r * r)
    out_ref[...] = jnp.full(out_ref.shape, partial, dtype=out_ref.dtype)


# ---------------------------------------------------------------------------
# Generation-aware tiling defaults
# ---------------------------------------------------------------------------
def _tpu_defaults():
    """Block-size / VMEM-limit / tanh-dtype defaults per TPU generation."""
    kind = ""
    try:
        kind = jax.devices()[0].device_kind.lower()
    except Exception:  # pragma: no cover - device query should not be fatal
        pass
    if "v6" in kind:        # v6e: 128 MiB VMEM, bf16 EUP available
        return dict(target_block_bytes=8 << 20, vmem_limit_bytes=96 << 20,
                    bf16_tanh=True, min_blocks=2)
    if "v7" in kind:        # v7x: 64 MiB VMEM, EUP-bound here -> bf16 tanh mandatory
        return dict(target_block_bytes=4 << 20, vmem_limit_bytes=48 << 20,
                    bf16_tanh=True, min_blocks=2)
    if "v5e" in kind or "v5 lite" in kind or "v5litepod" in kind:
        return dict(target_block_bytes=8 << 20, vmem_limit_bytes=96 << 20,
                    bf16_tanh=False, min_blocks=2)   # no bf16 EUP path on v5e
    # Unknown / older generations: conservative defaults.
    return dict(target_block_bytes=4 << 20, vmem_limit_bytes=None,
                bf16_tanh=False, min_blocks=2)


def _choose_block_lanes(total_lanes, channels, target_block_bytes, min_blocks):
    """Largest lane-dense block (multiple of 128, divides total_lanes) whose
    per-input footprint stays under target_block_bytes, keeping at least
    `min_blocks` grid steps when possible (v7x megacore sharding + pipelining).
    Never falls back to 'whole problem in one block' past the byte target."""
    assert total_lanes % 128 == 0
    units = total_lanes // 128
    bytes_per_unit = channels * 128 * 4          # f32 input bytes per 128 lanes
    best = 128
    for d in range(1, units + 1):
        if units % d:
            continue
        lanes = d * 128
        if lanes > 128:
            if d * bytes_per_unit > target_block_bytes:
                continue
            if units // d < min_blocks:
                continue
        best = max(best, lanes)
    return best


# ---------------------------------------------------------------------------
# Wrappers
# ---------------------------------------------------------------------------
def kdiffusion_loss_cm(x_cm, noise_cm, sigma_lanes, w1, w2, tw, tb, *,
                       sigma_data=SIGMA_DATA, block_lanes=None, bf16_tanh=None,
                       target_block_bytes=None, vmem_limit_bytes=None,
                       min_blocks=None):
    """KDiffusion.forward() loss on channel-major activations (the fast path).

    x_cm, noise_cm: (C, L) with L = B*T, lane index = b*T + t.  Store activations
                    upstream in this layout -- no HBM transpose happens here.
    sigma_lanes:    (L,) per-lane sigma, i.e. sigma[b] repeated T times.
    w1: (H, C)  w2: (C, H)  tw, tb: (H, 1)   synthetic `net` parameters.
    Returns the scalar loss (mean over batch of weighted per-batch MSE).
    """
    defaults = _tpu_defaults()
    if bf16_tanh is None:
        bf16_tanh = defaults["bf16_tanh"]
    if target_block_bytes is None:
        target_block_bytes = defaults["target_block_bytes"]
    if vmem_limit_bytes is None:
        vmem_limit_bytes = defaults["vmem_limit_bytes"]
    if min_blocks is None:
        min_blocks = defaults["min_blocks"]

    C, L = x_cm.shape
    H = w1.shape[0]
    x_cm = x_cm.astype(jnp.float32)
    noise_cm = noise_cm.astype(jnp.float32)
    sig = jnp.reshape(sigma_lanes, (1, L)).astype(jnp.float32)

    # Pad the lane axis to a multiple of 128 (lane-dense loads/stores; replaces the
    # old whole-batch-in-one-block VMEM-OOM fallback).  Zero-padded x/noise plus a
    # zeroed augmented column mean padded lanes contribute exactly 0 to the SSE.
    Lp = ((L + 127) // 128) * 128
    if Lp != L:
        pad = Lp - L
        x_cm = jnp.pad(x_cm, ((0, 0), (0, pad)))
        noise_cm = jnp.pad(noise_cm, ((0, 0), (0, pad)))
        sig = jnp.pad(sig, ((0, 0), (0, pad)), constant_values=1.0)  # keep log finite

    # [W1 | tw | tb]: bias folded into the MXU contraction (K = C + 2), resident.
    w1aug = jnp.concatenate(
        [w1.astype(jnp.float32), tw.astype(jnp.float32), tb.astype(jnp.float32)],
        axis=1)                                                      # (H, C+2)
    w2 = w2.astype(jnp.float32)

    if block_lanes is None:
        block_lanes = _choose_block_lanes(Lp, C, target_block_bytes, min_blocks)
    nb = Lp // block_lanes

    kernel = functools.partial(
        _kdiffusion_kernel, sigma_data=float(sigma_data), n_valid=int(L),
        block_lanes=int(block_lanes), bf16_tanh=bool(bf16_tanh))

    flops = 2 * (C + 2) * H * Lp + 2 * H * C * Lp + 12 * C * Lp   # two matmuls + VPU
    transcendentals = Lp * (H + 2)                                # tanh + log + rsqrt
    bytes_accessed = (2 * C * Lp + Lp + H * (C + 2) + C * H) * 4 + nb * 128 * 4

    compiler_kwargs = dict(dimension_semantics=("parallel",))     # blocks independent
    if vmem_limit_bytes is not None:
        compiler_kwargs["vmem_limit_bytes"] = int(vmem_limit_bytes)

    partials = pl.pallas_call(
        kernel,
        grid=(nb,),
        in_specs=[
            pl.BlockSpec((1, block_lanes), lambda i: (0, i)),      # sigma lanes
            pl.BlockSpec((C, block_lanes), lambda i: (0, i)),      # x (channel-major)
            pl.BlockSpec((C, block_lanes), lambda i: (0, i)),      # noise
            pl.BlockSpec((H, C + 2), lambda i: (0, 0)),            # [W1 | tw | tb]
            pl.BlockSpec((C, H), lambda i: (0, 0)),                # W2
        ],
        out_specs=pl.BlockSpec((1, 1, 128), lambda i: (i, 0, 0)),
        out_shape=jax.ShapeDtypeStruct((nb, 1, 128), jnp.float32),
        compiler_params=pltpu.CompilerParams(**compiler_kwargs),
        cost_estimate=pl.CostEstimate(
            flops=int(flops), transcendentals=int(transcendentals),
            bytes_accessed=int(bytes_accessed)),
    )(sig, x_cm, noise_cm, w1aug, w2)

    # losses.mean() == (sum of per-block weighted SSE) / (B*C*T) -- cheap glue.
    return jnp.sum(partials[:, 0, 0]) / (C * L)


def kdiffusion_loss(x, noise, sigmas, w1, w2, tw, tb, **kwargs):
    """(B, C, T) convenience wrapper.  NOTE: performs a layout transpose in HBM
    before the kernel (~2x input traffic on a bandwidth-bound kernel) -- prefer
    storing activations channel-major and calling kdiffusion_loss_cm directly."""
    B, C, T = x.shape
    x_cm = jnp.transpose(x, (1, 0, 2)).reshape(C, B * T)
    n_cm = jnp.transpose(noise, (1, 0, 2)).reshape(C, B * T)
    sigma_lanes = jnp.repeat(sigmas, T)
    return kdiffusion_loss_cm(x_cm, n_cm, sigma_lanes, w1, w2, tw, tb, **kwargs)


# ---------------------------------------------------------------------------
# Pure-JAX reference (PyTorch forward semantics, (B, C, T) layout)
# ---------------------------------------------------------------------------
def _reference_loss(x, noise, sigmas, w1, w2, tw, tb, sigma_data=SIGMA_DATA):
    s = sigmas[:, None, None]
    x_noisy = x + s * noise
    sd2 = sigma_data ** 2
    c_skip = sd2 / (s ** 2 + sd2)
    c_out = s * sigma_data * (sd2 + s ** 2) ** (-0.5)
    c_in = (s ** 2 + sd2) ** (-0.5)
    c_noise = jnp.log(sigmas) * 0.25
    h = jnp.tanh(jnp.einsum("hc,bct->bht", w1, c_in * x_noisy)
                 + (tw[None, :, :] * c_noise[:, None, None] + tb[None, :, :]))
    x_pred = jnp.einsum("ch,bht->bct", w2, h)
    x_denoised = c_skip * x_noisy + c_out * x_pred
    losses = jnp.mean((x_denoised - x) ** 2, axis=(1, 2))
    losses = losses * (sigmas ** 2 + sd2) * (sigmas * sigma_data) ** (-2)
    return jnp.mean(losses)


if __name__ == "__main__":
    B, C, T, H = 2, 4, 16, 32

    key = jax.random.PRNGKey(0)
    kx, kn, ks, kw1, kw2, ktw, ktb = jax.random.split(key, 7)

    # Activations stored channel-major upstream (C, B*T): no HBM transpose on the
    # hot path.  Lane index = b*T + t.
    x_cm = jax.random.normal(kx, (C, B * T), dtype=jnp.float32)
    n_cm = jax.random.normal(kn, (C, B * T), dtype=jnp.float32)
    # sigma_distribution: LogNormal(mean=-3.0, std=1.0), one sample per batch element
    sigmas = jnp.exp(SIGMA_MEAN + SIGMA_STD *
                     jax.random.normal(ks, (B,), dtype=jnp.float32))
    sigma_lanes = jnp.repeat(sigmas, T)

    # Deterministic synthetic `net` parameters.
    w1 = 0.1 * jax.random.normal(kw1, (H, C), dtype=jnp.float32)
    w2 = 0.1 * jax.random.normal(kw2, (C, H), dtype=jnp.float32)
    tw = 0.1 * jax.random.normal(ktw, (H, 1), dtype=jnp.float32)
    tb = 0.1 * jax.random.normal(ktb, (H, 1), dtype=jnp.float32)

    defaults = _tpu_defaults()

    # Fast path: channel-major activations, no wrapper-side transpose.
    loss = jax.block_until_ready(
        kdiffusion_loss_cm(x_cm, n_cm, sigma_lanes, w1, w2, tw, tb))

    # (B, C, T) views only for the reference / convenience-wrapper cross-check.
    x_bct = jnp.transpose(x_cm.reshape(C, B, T), (1, 0, 2))
    n_bct = jnp.transpose(n_cm.reshape(C, B, T), (1, 0, 2))
    loss_bct = jax.block_until_ready(
        kdiffusion_loss(x_bct, n_bct, sigmas, w1, w2, tw, tb))
    ref = _reference_loss(x_bct, n_bct, sigmas, w1, w2, tw, tb)

    # bf16 tanh (enabled on v6e/v7x) loosens the comparison slightly.
    rtol = 1e-2 if defaults["bf16_tanh"] else 1e-3
    assert jnp.isfinite(loss), "kernel produced non-finite loss"
    assert jnp.allclose(loss, ref, rtol=rtol, atol=1e-6), (loss, ref)
    assert jnp.allclose(loss_bct, ref, rtol=rtol, atol=1e-6), (loss_bct, ref)
    print("KERNEL_OK")
</pallas_src>

<mosaic_0001>
module attributes {stable_mosaic.version = 11 : i64} {
  func.func @_kdiffusion_kernel(%arg0: i32, %arg1: memref<1x128xf32, #tpu.memory_space<vmem>>, %arg2: memref<4x128xf32, #tpu.memory_space<vmem>>, %arg3: memref<4x128xf32, #tpu.memory_space<vmem>>, %arg4: memref<32x6xf32, #tpu.memory_space<vmem>>, %arg5: memref<4x32xf32, #tpu.memory_space<vmem>>, %arg6: memref<1x1x128xf32, #tpu.memory_space<vmem>>) attributes {dimension_semantics = [#tpu.dimension_semantics<parallel>], iteration_bounds = array<i64: 1>, scalar_prefetch = 0 : i64, scratch_operands = 0 : i64, tpu.core_type = #tpu.core_type<tc>, window_params = [{transform_indices = @transform_0, window_bounds = array<i64: 1, 128>}, {transform_indices = @transform_1, window_bounds = array<i64: 4, 128>}, {transform_indices = @transform_2, window_bounds = array<i64: 4, 128>}, {pipeline_mode = #tpu.pipeline_mode<synchronous>, transform_indices = @transform_3, window_bounds = array<i64: 32, 6>}, {pipeline_mode = #tpu.pipeline_mode<synchronous>, transform_indices = @transform_4, window_bounds = array<i64: 4, 32>}, {transform_indices = @transform_5, window_bounds = array<i64: 1, 1, 128>}]} {
    %c0 = arith.constant 0 : index
    %c0_0 = arith.constant 0 : index
    %0 = vector.load %arg1[%c0, %c0_0] : memref<1x128xf32, #tpu.memory_space<vmem>>, vector<1x128xf32>
    %c0_1 = arith.constant 0 : index
    %c0_2 = arith.constant 0 : index
    %1 = vector.load %arg2[%c0_1, %c0_2] : memref<4x128xf32, #tpu.memory_space<vmem>>, vector<4x128xf32>
    %c0_3 = arith.constant 0 : index
    %c0_4 = arith.constant 0 : index
    %2 = vector.load %arg3[%c0_3, %c0_4] : memref<4x128xf32, #tpu.memory_space<vmem>>, vector<4x128xf32>
    %3 = arith.mulf %0, %0 : vector<1x128xf32>
    %cst = arith.constant 4.000000e-02 : f32
    %4 = vector.broadcast %cst : f32 to vector<1x128xf32>
    %5 = arith.addf %3, %4 : vector<1x128xf32>
    %6 = math.rsqrt %5 : vector<1x128xf32>
    %7 = math.log %0 : vector<1x128xf32>
    %cst_5 = arith.constant 2.500000e-01 : f32
    %8 = vector.broadcast %cst_5 : f32 to vector<1x128xf32>
    %9 = arith.mulf %7, %8 : vector<1x128xf32>
    %10 = tpu.iota {dimensions = array<i32: 1>} : vector<1x128xi32>
    %c128_i32 = arith.constant 128 : i32
    %11 = arith.muli %arg0, %c128_i32 : i32
    %12 = vector.broadcast %11 : i32 to vector<1x128xi32>
    %13 = arith.addi %12, %10 : vector<1x128xi32>
    %c32_i32 = arith.constant 32 : i32
    %14 = vector.broadcast %c32_i32 : i32 to vector<1x128xi32>
    %15 = arith.cmpi slt, %13, %14 : vector<1x128xi32>
    %16 = arith.extui %15 : vector<1x128xi1> to vector<1x128xi32>
    %17 = arith.sitofp %16 : vector<1x128xi32> to vector<1x128xf32>
    %18 = vector.broadcast %0 : vector<1x128xf32> to vector<4x128xf32>
    %19 = arith.mulf %18, %2 : vector<4x128xf32>
    %20 = arith.addf %1, %19 : vector<4x128xf32>
    %21 = vector.broadcast %6 : vector<1x128xf32> to vector<4x128xf32>
    %22 = arith.mulf %21, %20 : vector<4x128xf32>
    %23 = arith.mulf %9, %17 : vector<1x128xf32>
    %24 = tpu.concatenate %22, %23, %17 in 0 : vector<4x128xf32>, vector<1x128xf32>, vector<1x128xf32> -> vector<6x128xf32>
    %c0_6 = arith.constant 0 : index
    %c0_7 = arith.constant 0 : index
    %25 = vector.load %arg4[%c0_6, %c0_7] : memref<32x6xf32, #tpu.memory_space<vmem>>, vector<32x6xf32>
    %cst_8 = arith.constant dense<0.000000e+00> : vector<32x128xf32>
    %26 = tpu.matmul %25, %24, %cst_8 {dimension_numbers = #tpu.dot_dimension_numbers<[1], [0], [0], [1], [0, 0, 1, 1], [], []>} : vector<32x6xf32>, vector<6x128xf32>, vector<32x128xf32> -> vector<32x128xf32>
    %27 = math.tanh %26 : vector<32x128xf32>
    %c0_9 = arith.constant 0 : index
    %c0_10 = arith.constant 0 : index
    %28 = vector.load %arg5[%c0_9, %c0_10] : memref<4x32xf32, #tpu.memory_space<vmem>>, vector<4x32xf32>
    %cst_11 = arith.constant dense<0.000000e+00> : vector<4x128xf32>
    %29 = tpu.matmul %28, %27, %cst_11 {dimension_numbers = #tpu.dot_dimension_numbers<[1], [0], [0], [1], [0, 0, 1, 1], [], []>} : vector<4x32xf32>, vector<32x128xf32>, vector<4x128xf32> -> vector<4x128xf32>
    %cst_12 = arith.constant 2.000000e-01 : f32
    %30 = vector.broadcast %cst_12 : f32 to vector<1x128xf32>
    %31 = arith.mulf %30, %6 : vector<1x128xf32>
    %32 = arith.mulf %0, %6 : vector<1x128xf32>
    %cst_13 = arith.constant 5.000000e+00 : f32
    %33 = vector.broadcast %cst_13 : f32 to vector<1x128xf32>
    %34 = arith.mulf %32, %33 : vector<1x128xf32>
    %35 = vector.broadcast %31 : vector<1x128xf32> to vector<4x128xf32>
    %36 = arith.mulf %35, %2 : vector<4x128xf32>
    %37 = arith.addf %29, %36 : vector<4x128xf32>
    %38 = vector.broadcast %34 : vector<1x128xf32> to vector<4x128xf32>
    %39 = arith.mulf %38, %1 : vector<4x128xf32>
    %40 = arith.subf %37, %39 : vector<4x128xf32>
    %41 = arith.mulf %40, %40 : vector<4x128xf32>
    %42 = vector.shape_cast %41 : vector<4x128xf32> to vector<1x4x128xf32>
    %cst_14 = arith.constant dense<0.000000e+00> : vector<1xf32>
    %43 = vector.multi_reduction <add>, %42, %cst_14 [1, 2] : vector<1x4x128xf32> to vector<1xf32>
    %44 = vector.shape_cast %43 : vector<1xf32> to vector<1x1x1xf32>
    %45 = vector.extract %44[0, 0, 0] : f32 from vector<1x1x1xf32>
    %46 = vector.broadcast %45 : f32 to vector<1x1x128xf32>
    %c0_15 = arith.constant 0 : index
    %c0_16 = arith.constant 0 : index
    %c0_17 = arith.constant 0 : index
    %47 = vector.load %arg6[%c0_15, %c0_16, %c0_17] : memref<1x1x128xf32, #tpu.memory_space<vmem>>, vector<1x1x128xf32>
    tpu.vector_store %arg6[%c0_15, %c0_16, %c0_17], %46 {strides = array<i32>} : memref<1x1x128xf32, #tpu.memory_space<vmem>>, vector<1x1x128xf32>,
    return
  }
  func.func @transform_0(%arg0: i32) -> (i32, i32) {
    %c0_i32 = arith.constant 0 : i32
    %c0_i32_0 = arith.constant 0 : i32
    return %c0_i32, %arg0 : i32, i32
  }
  func.func @transform_1(%arg0: i32) -> (i32, i32) {
    %c0_i32 = arith.constant 0 : i32
    %c0_i32_0 = arith.constant 0 : i32
    return %c0_i32, %arg0 : i32, i32
  }
  func.func @transform_2(%arg0: i32) -> (i32, i32) {
    %c0_i32 = arith.constant 0 : i32
    %c0_i32_0 = arith.constant 0 : i32
    return %c0_i32, %arg0 : i32, i32
  }
  func.func @transform_3(%arg0: i32) -> (i32, i32) {
    %c0_i32 = arith.constant 0 : i32
    %c0_i32_0 = arith.constant 0 : i32
    %c0_i32_1 = arith.constant 0 : i32
    return %c0_i32, %c0_i32_0 : i32, i32
  }
  func.func @transform_4(%arg0: i32) -> (i32, i32) {
    %c0_i32 = arith.constant 0 : i32
    %c0_i32_0 = arith.constant 0 : i32
    %c0_i32_1 = arith.constant 0 : i32
    return %c0_i32, %c0_i32_0 : i32, i32
  }
  func.func @transform_5(%arg0: i32) -> (i32, i32, i32) {
    %c0_i32 = arith.constant 0 : i32
    %c0_i32_0 = arith.constant 0 : i32
    %c0_i32_1 = arith.constant 0 : i32
    return %arg0, %c0_i32, %c0_i32_0 : i32, i32, i32
  }
}

</mosaic_0001>

<llo_original>
// kernel: tpu_custom_call.1
$region0: #{tpu_custom_call.1}
  #allocation0 [shape = 'u32[]', space=smem, size = 0x4, offset = 0x4, fixed_abs, tag = 'smem constant byte address 0x4 - core index']
  #allocation1 [shape = 'u32[144,128]{1,0:T(1,128)}', space=vmem, size = 0x12000, scoped, tag = 'internal scratch']
  %s0 = inlined_call_operand.vmem [shape: f32[1,128], index: 0, kind: input, shape index: {}]
  %s1 = inlined_call_operand.vmem [shape: f32[4,128], index: 1, kind: input, shape index: {}]
  %s2 = inlined_call_operand.vmem [shape: f32[4,128], index: 2, kind: input, shape index: {}]
  %s3 = inlined_call_operand.vmem [shape: f32[32,6], index: 3, kind: input, shape index: {}]
  %s4 = inlined_call_operand.vmem [shape: f32[4,32], index: 4, kind: input, shape index: {}]
  %s5 = inlined_call_operand.hbm [shape: f32[1,1,128], index: 5, kind: output, shape index: {}]
  %s6 = sld [smem:[#allocation0]]
  $region30: #{tpu_custom_call.1} parent=0
    _
  %s8 = ssub.s32 1, %s6
  %s9 = scalar_select 0, %s8, %s6
  $region1: #{tpu_custom_call.1} parent=0
    #allocation2 [shape = 'u8[512]{0}', space=vmem, size = 0x400, scoped, tag = 'output window, operand 0, single buffered']
    #allocation3 [shape = 's32[1]{0}', space=sflag, size = 0x4, scoped, tag = 'scoped memory for tpu_custom_call.1']
    %10 = vsyncpa [#allocation3], 0
    // Predicated region
    $region2: #{tpu_custom_call.1} parent=1 // pred_check
      _
    $region3: #{tpu_custom_call.1} parent=1 // pred_check_branch
      %12 = sbr.rel (0) target = $region5
    $region4: #{tpu_custom_call.1} parent=1 // pred_region
      _
    $region5: #{tpu_custom_call.1} parent=1 // pred_fallthru
      _
    // Predicated region
    $region6: #{tpu_custom_call.1} parent=1 // pred_check
      _
    $region7: #{tpu_custom_call.1} parent=1 // pred_check_branch
      %14 = sbr.rel (0) target = $region9
    $region8: #{tpu_custom_call.1} parent=1 // pred_region
      _
    $region9: #{tpu_custom_call.1} parent=1 // pred_fallthru
      _
    // Predicated region
    $region10: #{tpu_custom_call.1} parent=1 // pred_check
      _
    $region11: #{tpu_custom_call.1} parent=1 // pred_check_branch
      %16 = sbr.rel (0) target = $region13
    $region12: #{tpu_custom_call.1} parent=1 // pred_region
      _
    $region13: #{tpu_custom_call.1} parent=1 // pred_fallthru
      _
    // Predicated region
    $region14: #{tpu_custom_call.1} parent=1 // pred_check
      _
    $region15: #{tpu_custom_call.1} parent=1 // pred_check_branch
      %18 = sbr.rel (0) target = $region17
    $region16: #{tpu_custom_call.1} parent=1 // pred_region
      _
    $region17: #{tpu_custom_call.1} parent=1 // pred_fallthru
      _
    // Predicated region
    $region18: #{tpu_custom_call.1} parent=1 // pred_check
      _
    $region19: #{tpu_custom_call.1} parent=1 // pred_check_branch
      %20 = sbr.rel (0) target = $region21
    $region20: #{tpu_custom_call.1} parent=1 // pred_region
      _
    $region21: #{tpu_custom_call.1} parent=1 // pred_fallthru
      _
    %v21 = vld [vmem:[%s0] sm:$0x1]
    %v22 = vld [vmem:[%s1] sm:$0xf]
    %v23 = vld [vmem:[%s2] sm:$0xf]
    %v24 = vmul.f32 %v21, %v21
    %v25 = vadd.f32 %v24, 0.04
    %v26 = vrsqrt.pop %v25
    %v27 = vlog2.pop %v21
    %v28 = vmul.f32 %v27, 0.6931472
    %v29 = vmul.f32 %v28, 0.25
    %v30 = vlaneseq
    %v31 = vand.u32 %v30, 127
    %s32 = smul.u32 0, 128
    %v33 = vstv %s32
    %v34 = vadd.s32 %v33, %v31
    %vm35 = vcmp.lt.s32.totalorder %v34, 32
    %v36 = vsel %vm35, 1, 0
    %v37 = vcvt.s32.f32 %v36
    %v39 = vlaneseq
    %v40 = vshrl.u32 %v39, 7
    %v41 = vsub.s32 0, %v40
    %v42 = vrot.slane %v21, %v41
    %v44 = vmul.f32 %v42, %v23
    %v45 = vadd.f32 %v22, %v44
    %v47 = vlaneseq
    %v48 = vshrl.u32 %v47, 7
    %v49 = vsub.s32 0, %v48
    %v50 = vrot.slane %v26, %v49
    %v52 = vmul.f32 %v50, %v45
    %v53 = vmul.f32 %v29, %v37
    %v55 = vlaneseq
    %v56 = vshrl.u32 %v55, 7
    %v57 = vsub.s32 0, %v56
    %v58 = vrot.slane %v53, %v57
    %vm60 = vcmask 1043456
    %v61 = vsel %vm60, %v52, %v58
    %vm62 = vcmask 1044480
    %v63 = vsel %vm62, %v61, %v37
    %v64 = vld [vmem:[%s3] sm:$0xff]
    %v65 = vld [vmem:[%s3 + $0x8] sm:$0xff]
    %v66 = vld [vmem:[%s3 + $0x10] sm:$0xff]
    %v67 = vld [vmem:[%s3 + $0x18] sm:$0xff]
    %vm68 = vcmask 48128
    %v70 = vsel %vm68, %v64, 0
    %v73 = vsel %vm68, %v65, 0
    %v76 = vsel %vm68, %v66, 0
    %v79 = vsel %vm68, %v67, 0
    %vm81 = vcmask 1045504
    %v83 = vsel %vm81, %v63, 0
    %85 = vmatprep.subr.mxu0 0.0
    %86 = vmatpush1.msra.mxu0 0.0
    %87 = vmatprep.subr.mxu0 0.0
    %88 = vmatpush1.msra.mxu0 0.0
    %89 = vmatprep.subr.mxu0 0.0
    %90 = vmatpush1.msra.mxu0 0.0
    %91 = vmatprep.subr.mxu0 0.0
    %92 = vmatpush1.msra.mxu0 0.0
    %93 = vmatprep.subr.mxu0 0.0
    %94 = vmatpush1.msra.mxu0 0.0
    %95 = vmatprep.subr.mxu0 0.0
    %96 = vmatpush1.msra.mxu0 0.0
    %97 = vmatprep.subr.mxu0 0.0
    %98 = vmatpush1.msra.mxu0 0.0
    %99 = vmatprep.subr.mxu0 0.0
    %100 = vmatpush1.msra.mxu0 0.0
    %101 = vmatprep.subr.mxu0 0.0
    %102 = vmatpush1.msra.mxu0 0.0
    %103 = vmatprep.subr.mxu0 0.0
    %104 = vmatpush1.msra.mxu0 0.0
    %105 = vmatprep.subr.mxu0 0.0
    %106 = vmatpush1.msra.mxu0 0.0
    %107 = vmatprep.subr.mxu0 0.0
    %108 = vmatpush1.msra.mxu0 0.0
    %109 = vmatprep.subr.mxu0 0.0
    %110 = vmatpush1.msra.mxu0 0.0
    %111 = vmatprep.subr.mxu0 0.0
    %112 = vmatpush1.msra.mxu0 0.0
    %113 = vmatprep.subr.mxu0 0.0
    %114 = vmatpush1.msra.mxu0 0.0
    %115 = vmatprep.subr.mxu0 0.0
    %116 = vmatpush1.msra.mxu0 %v83
    %117 = vmatprep.subr.mxu0 0.0
    %118 = vmatpush2.msra.mxu0 0.0
    %119 = vmatprep.subr.mxu0 0.0
    %120 = vmatpush2.msra.mxu0 0.0
    %121 = vmatprep.subr.mxu0 0.0
    %122 = vmatpush2.msra.mxu0 0.0
    %123 = vmatprep.subr.mxu0 0.0
    %124 = vmatpush2.msra.mxu0 0.0
    %125 = vmatprep.subr.mxu0 0.0
    %126 = vmatpush2.msra.mxu0 0.0
    %127 = vmatprep.subr.mxu0 0.0
    %128 = vmatpush2.msra.mxu0 0.0
    %129 = vmatprep.subr.mxu0 0.0
    %130 = vmatpush2.msra.mxu0 0.0
    %131 = vmatprep.subr.mxu0 0.0
    %132 = vmatpush2.msra.mxu0 0.0
    %133 = vmatprep.subr.mxu0 0.0
    %134 = vmatpush2.msra.mxu0 0.0
    %135 = vmatprep.subr.mxu0 0.0
    %136 = vmatpush2.msra.mxu0 0.0
    %137 = vmatprep.subr.mxu0 0.0
    %138 = vmatpush2.msra.mxu0 0.0
    %139 = vmatprep.subr.mxu0 0.0
    %140 = vmatpush2.msra.mxu0 0.0
    %141 = vmatprep.subr.mxu0 0.0
    %142 = vmatpush2.msra.mxu0 0.0
    %143 = vmatprep.subr.mxu0 0.0
    %144 = vmatpush2.msra.mxu0 0.0
    %145 = vmatprep.subr.mxu0 0.0
    %146 = vmatpush2.msra.mxu0 0.0
    %147 = vmatprep.subr.mxu0 0.0
    %148 = vmatpush2.msra.mxu0 0.0
    %149 = vmatprep.mubr.f32.mxu0 0.0
    %150 = vmatmul.mubr.f32.gmra.mxu0 %v70
    %v151 = vpop.f32.mrf.mxu0
    %v152 = vadd.f32 0.0, %v151
    %v153 = vpop.f32.mrf.mxu0
    %154 = vmatprep.mubr.f32.mxu0 0.0
    %155 = vmatmul.mubr.f32.gmra.mxu0 %v73
    %v156 = vpop.f32.mrf.mxu0
    %v157 = vadd.f32 0.0, %v156
    %v158 = vpop.f32.mrf.mxu0
    %159 = vmatprep.mubr.f32.mxu0 0.0
    %160 = vmatmul.mubr.f32.gmra.mxu0 %v76
    %v161 = vpop.f32.mrf.mxu0
    %v162 = vadd.f32 0.0, %v161
    %v163 = vpop.f32.mrf.mxu0
    %164 = vmatprep.mubr.f32.mxu0 0.0
    %165 = vmatmul.mubr.f32.gmra.mxu0 %v79
    %v166 = vpop.f32.mrf.mxu0
    %v167 = vadd.f32 0.0, %v166
    %v168 = vpop.f32.mrf.mxu0
    %169 = vdwg.mxu0
    %v170 = vtanh.pop %v152
    %v171 = vtanh.pop %v157
    %v172 = vtanh.pop %v162
    %v173 = vtanh.pop %v167
    %v174 = vld [vmem:[%s4] sm:$0xf]
    %v175 = vmul.f32 %v26, 0.2
    %v176 = vmul.f32 %v21, %v26
    %v177 = vmul.f32 %v176, 5.0
    %v179 = vlaneseq
    %v180 = vshrl.u32 %v179, 7
    %v181 = vsub.s32 0, %v180
    %v182 = vrot.slane %v175, %v181
    %v184 = vmul.f32 %v182, %v23
    %vm185 = vcmask 261120
    %v187 = vsel %vm185, %v174, 0
    %189 = vmatprep.subr.mxu0 0.0
    %190 = vmatpush1.msra.mxu0 0.0
    %191 = vmatprep.subr.mxu0 0.0
    %192 = vmatpush1.msra.mxu0 0.0
    %193 = vmatprep.subr.mxu0 0.0
    %194 = vmatpush1.msra.mxu0 0.0
    %195 = vmatprep.subr.mxu0 0.0
    %196 = vmatpush1.msra.mxu0 0.0
    %197 = vmatprep.subr.mxu0 0.0
    %198 = vmatpush1.msra.mxu0 0.0
    %199 = vmatprep.subr.mxu0 0.0
    %200 = vmatpush1.msra.mxu0 0.0
    %201 = vmatprep.subr.mxu0 0.0
    %202 = vmatpush1.msra.mxu0 0.0
    %203 = vmatprep.subr.mxu0 0.0
    %204 = vmatpush1.msra.mxu0 0.0
    %205 = vmatprep.subr.mxu0 0.0
    %206 = vmatpush1.msra.mxu0 0.0
    %207 = vmatprep.subr.mxu0 0.0
    %208 = vmatpush1.msra.mxu0 0.0
    %209 = vmatprep.subr.mxu0 0.0
    %210 = vmatpush1.msra.mxu0 0.0
    %211 = vmatprep.subr.mxu0 0.0
    %212 = vmatpush1.msra.mxu0 0.0
    %213 = vmatprep.subr.mxu0 0.0
    %214 = vmatpush1.msra.mxu0 %v173
    %215 = vmatprep.subr.mxu0 0.0
    %216 = vmatpush1.msra.mxu0 %v172
    %217 = vmatprep.subr.mxu0 0.0
    %218 = vmatpush1.msra.mxu0 %v171
    %219 = vmatprep.subr.mxu0 0.0
    %220 = vmatpush1.msra.mxu0 %v170
    %221 = vmatprep.subr.mxu0 0.0
    %222 = vmatpush2.msra.mxu0 0.0
    %223 = vmatprep.subr.mxu0 0.0
    %224 = vmatpush2.msra.mxu0 0.0
    %225 = vmatprep.subr.mxu0 0.0
    %226 = vmatpush2.msra.mxu0 0.0
    %227 = vmatprep.subr.mxu0 0.0
    %228 = vmatpush2.msra.mxu0 0.0
    %229 = vmatprep.subr.mxu0 0.0
    %230 = vmatpush2.msra.mxu0 0.0
    %231 = vmatprep.subr.mxu0 0.0
    %232 = vmatpush2.msra.mxu0 0.0
    %233 = vmatprep.subr.mxu0 0.0
    %234 = vmatpush2.msra.mxu0 0.0
    %235 = vmatprep.subr.mxu0 0.0
    %236 = vmatpush2.msra.mxu0 0.0
    %237 = vmatprep.subr.mxu0 0.0
    %238 = vmatpush2.msra.mxu0 0.0
    %239 = vmatprep.subr.mxu0 0.0
    %240 = vmatpush2.msra.mxu0 0.0
    %241 = vmatprep.subr.mxu0 0.0
    %242 = vmatpush2.msra.mxu0 0.0
    %243 = vmatprep.subr.mxu0 0.0
    %244 = vmatpush2.msra.mxu0 0.0
    %245 = vmatprep.subr.mxu0 0.0
    %246 = vmatpush2.msra.mxu0 0.0
    %247 = vmatprep.subr.mxu0 0.0
    %248 = vmatpush2.msra.mxu0 0.0
    %249 = vmatprep.subr.mxu0 0.0
    %250 = vmatpush2.msra.mxu0 0.0
    %251 = vmatprep.subr.mxu0 0.0
    %252 = vmatpush2.msra.mxu0 0.0
    %253 = vmatprep.mubr.f32.mxu0 0.0
    %254 = vmatmul.mubr.f32.gmra.mxu0 %v187
    %v255 = vpop.f32.mrf.mxu0
    %v256 = vadd.f32 %v184, %v255
    %v257 = vpop.f32.mrf.mxu0
    %258 = vdwg.mxu0
    %v260 = vlaneseq
    %v261 = vshrl.u32 %v260, 7
    %v262 = vsub.s32 0, %v261
    %v263 = vrot.slane %v177, %v262
    %v265 = vmul.f32 %v263, %v22
    %v266 = vsub.f32 %v256, %v265
    %v267 = vmul.f32 %v266, %v266
    %v268 = vsel %vm60, %v267, 0.0
    %269 = vadd.xlane.f32.xlu0 %v268
    %v270 = vpop.xlane.xlu0 %269
    %v271 = vrot.slane %v270, 4
    %v272 = vadd.f32 %v270, %v271
    %v273 = vrot.slane %v272, 2
    %v274 = vadd.f32 %v272, %v273
    %v275 = vrot.slane %v274, 1
    %v276 = vadd.f32 %v274, %v275
    %s277 = vtos %v276
    %v278 = vstv %s277
    %279 = vst [vmem:[#allocation2] sm:$0x1] %v278
    // Predicated region
    $region22: #{tpu_custom_call.1} parent=1 // pred_check
      _
    $region23: #{tpu_custom_call.1} parent=1 // pred_check_branch
      %281 = sbr.rel (0) target = $region25
    $region24: #{tpu_custom_call.1} parent=1 // pred_region
      %s283 = ssub.s32 16, 16
      %284 = vsyncadd [#allocation3], %s283
      %s286 = sshll.u32 [#allocation2], 4
      %s287 = int_to_ptr.vmem [resolvable:$true] %s286
      %289 = dma.vmem_to_hbm [thread:$0]  %s287, 16, %s5, [#allocation3]
    $region25: #{tpu_custom_call.1} parent=1 // pred_fallthru
      _
    // Predicated region
    $region26: #{tpu_custom_call.1} parent=1 // pred_check
      _
    $region27: #{tpu_custom_call.1} parent=1 // pred_check_branch
      %291 = sbr.rel (0) target = $region29
    $region28: #{tpu_custom_call.1} parent=1 // pred_region
      %292 = dma.done [#allocation3], 16
    $region29: #{tpu_custom_call.1} parent=1 // pred_fallthru
      _
    %293 = vsyncpa [#allocation3], 1

</llo_original>
